<compile_context>
chip_gen: v6e
topology: v6e:2x2x1
jax: 0.10.0
libtpu: 0.0.40
codegen_flags: <defaults>
</compile_context>

<pallas_src>
import functools
import math

import jax
import jax.numpy as jnp
from jax.experimental import pallas as pl
from jax.experimental.pallas import tpu as pltpu


def _round_up(x, m):
    return ((x + m - 1) // m) * m


def _lmf_kernel(v_ref, a_ref, wv_ref, wa_ref, bv_ref, ba_ref, bias_ref, o_ref,
                *, rank, out_pad):
    """Single-tile LMF forward.

    v_ref   : (TB, Dv)            video features (one batch tile)
    a_ref   : (TB, Da)            audio features
    wv_ref  : (Dv, rank*out_pad)  video factor rows 1: (rank flattened into N,
                                  fusion_weights pre-folded)
    wa_ref  : (Da, rank*out_pad)  audio factor rows 1:
    bv_ref  : (1,  rank*out_pad)  video factor row 0 (ones-column row, scaled)
    ba_ref  : (1,  rank*out_pad)  audio factor row 0
    bias_ref: (1,  out_pad)       fusion bias (zero-padded)
    o_ref   : (TB, out_pad)       lane-dense output tile
    """
    fv = jnp.dot(v_ref[...], wv_ref[...],
                 preferred_element_type=jnp.float32) + bv_ref[...]
    fa = jnp.dot(a_ref[...], wa_ref[...],
                 preferred_element_type=jnp.float32) + ba_ref[...]
    zy = fv * fa                                       # (TB, rank*out_pad)

    # Weighted rank sum (weights already folded into the video factor):
    # sum the rank lane-aligned 128-wide slices.  rank is a static Python int.
    acc = zy[:, 0:out_pad]
    for r in range(1, rank):
        acc = acc + zy[:, r * out_pad:(r + 1) * out_pad]

    o_ref[...] = (acc + bias_ref[...]).astype(o_ref.dtype)


def video_audio_lmf(video_h, audio_h, video_factor, audio_factor,
                    fusion_weights, fusion_bias, *, batch_tile=256):
    """Pallas implementation of VideoAudioLMF.forward.

    video_h: (B, Dv), audio_h: (B, Da)
    video_factor: (rank, Dv+1, out), audio_factor: (rank, Da+1, out)
    fusion_weights: (1, rank), fusion_bias: (1, out)
    returns: (B, out) f32
    """
    f32 = jnp.float32
    B, Dv = video_h.shape
    Da = audio_h.shape[1]
    rank, dv1, out_dim = video_factor.shape
    assert dv1 == Dv + 1 and audio_factor.shape == (rank, Da + 1, out_dim)

    out_pad = _round_up(out_dim, 128)          # lane-dense width per rank slice
    n_pad = rank * out_pad                     # MXU N dimension

    # ---- one-time parameter re-layout (tiny; constant-folds under jit) ----
    def _prep(factor):
        w = factor[:, 1:, :].astype(f32)       # (rank, D, out)   weight rows
        b = factor[:, 0, :].astype(f32)        # (rank, out)      ones-column row
        w = jnp.pad(w, ((0, 0), (0, 0), (0, out_pad - out_dim)))
        b = jnp.pad(b, ((0, 0), (0, out_pad - out_dim)))
        return w, b

    vf_w, vf_b = _prep(video_factor)
    af_w, af_b = _prep(audio_factor)

    # Fold fusion_weights (1, rank) into the video factor (per-rank scale),
    # so the in-kernel rank contraction is a plain sum.
    wts = fusion_weights.astype(f32).reshape(rank, 1, 1)
    vf_w = vf_w * wts
    vf_b = vf_b * wts[:, :, 0]

    # Flatten rank into the matmul N dimension: (D, rank*out_pad).
    Wv = jnp.transpose(vf_w, (1, 0, 2)).reshape(Dv, n_pad)
    Wa = jnp.transpose(af_w, (1, 0, 2)).reshape(Da, n_pad)
    Bv = vf_b.reshape(1, n_pad)
    Ba = af_b.reshape(1, n_pad)
    bias = jnp.pad(fusion_bias.astype(f32), ((0, 0), (0, out_pad - out_dim)))

    # ---- batch tiling (only real data axis); "parallel" for megacore -------
    tb = min(_round_up(B, 8), batch_tile)
    b_pad = _round_up(B, tb)
    v = jnp.pad(video_h.astype(f32), ((0, b_pad - B), (0, 0)))
    a = jnp.pad(audio_h.astype(f32), ((0, b_pad - B), (0, 0)))

    kernel = functools.partial(_lmf_kernel, rank=rank, out_pad=out_pad)

    out_padded = pl.pallas_call(
        kernel,
        out_shape=jax.ShapeDtypeStruct((b_pad, out_pad), f32),
        grid_spec=pltpu.PrefetchScalarGridSpec(
            num_scalar_prefetch=0,
            grid=(b_pad // tb,),
            in_specs=[
                pl.BlockSpec((tb, Dv), lambda i: (i, 0)),        # video tile
                pl.BlockSpec((tb, Da), lambda i: (i, 0)),        # audio tile
                pl.BlockSpec((Dv, n_pad), lambda i: (0, 0)),     # Wv (resident)
                pl.BlockSpec((Da, n_pad), lambda i: (0, 0)),     # Wa (resident)
                pl.BlockSpec((1, n_pad), lambda i: (0, 0)),      # Bv row
                pl.BlockSpec((1, n_pad), lambda i: (0, 0)),      # Ba row
                pl.BlockSpec((1, out_pad), lambda i: (0, 0)),    # fusion bias
            ],
            out_specs=pl.BlockSpec((tb, out_pad), lambda i: (i, 0)),
        ),
        compiler_params=pltpu.CompilerParams(
            dimension_semantics=("parallel",)),
    )(v, a, Wv, Wa, Bv, Ba, bias)

    return out_padded[:B, :out_dim]


def _xavier_normal(key, shape):
    """Matches torch.nn.init.xavier_normal_ fan computation for >=2D tensors."""
    fan_in = shape[1] * math.prod(shape[2:]) if len(shape) > 2 else shape[1]
    fan_out = shape[0] * math.prod(shape[2:]) if len(shape) > 2 else shape[0]
    std = math.sqrt(2.0 / (fan_in + fan_out))
    return std * jax.random.normal(key, shape, dtype=jnp.float32)


def _reference(video_h, audio_h, vf, af, w, b):
    """Direct transcription of the PyTorch forward."""
    B = video_h.shape[0]
    ones = jnp.ones((B, 1), jnp.float32)
    _v = jnp.concatenate([ones, video_h], axis=1)
    _a = jnp.concatenate([ones, audio_h], axis=1)
    fv = jnp.matmul(_v, vf)          # (rank, B, out)
    fa = jnp.matmul(_a, af)          # (rank, B, out)
    zy = fv * fa
    out = jnp.matmul(w, jnp.transpose(zy, (1, 0, 2))).squeeze() + b
    return out.reshape(-1, b.shape[-1])


if __name__ == "__main__":
    batch = 8
    video_in, audio_in = 16, 12
    output_dim = 8
    rank = 4

    key = jax.random.PRNGKey(0)
    k_v, k_a, k_vf, k_af, k_w = jax.random.split(key, 5)

    video_h = jax.random.normal(k_v, (batch, video_in), dtype=jnp.float32)
    audio_h = jax.random.normal(k_a, (batch, audio_in), dtype=jnp.float32)

    video_factor = _xavier_normal(k_vf, (rank, video_in + 1, output_dim))
    audio_factor = _xavier_normal(k_af, (rank, audio_in + 1, output_dim))
    fusion_weights = _xavier_normal(k_w, (1, rank))
    fusion_bias = jnp.zeros((1, output_dim), dtype=jnp.float32)

    out = video_audio_lmf(video_h, audio_h, video_factor, audio_factor,
                          fusion_weights, fusion_bias)
    out = jax.block_until_ready(out)

    ref = _reference(video_h, audio_h, video_factor, audio_factor,
                     fusion_weights, fusion_bias)
    assert out.shape == (batch, output_dim)
    assert jnp.allclose(out, ref, atol=1e-5, rtol=1e-5), "mismatch vs reference"

    print("KERNEL_OK")
</pallas_src>

<mosaic_0001>
module attributes {stable_mosaic.version = 11 : i64} {
  func.func @_lmf_kernel(%arg0: i32, %arg1: memref<8x16xf32, #tpu.memory_space<vmem>>, %arg2: memref<8x12xf32, #tpu.memory_space<vmem>>, %arg3: memref<16x512xf32, #tpu.memory_space<vmem>>, %arg4: memref<12x512xf32, #tpu.memory_space<vmem>>, %arg5: memref<1x512xf32, #tpu.memory_space<vmem>>, %arg6: memref<1x512xf32, #tpu.memory_space<vmem>>, %arg7: memref<1x128xf32, #tpu.memory_space<vmem>>, %arg8: memref<8x128xf32, #tpu.memory_space<vmem>>) attributes {dimension_semantics = [#tpu.dimension_semantics<parallel>], iteration_bounds = array<i64: 1>, scalar_prefetch = 0 : i64, scratch_operands = 0 : i64, tpu.core_type = #tpu.core_type<tc>, window_params = [{transform_indices = @transform_0, window_bounds = array<i64: 8, 16>}, {transform_indices = @transform_1, window_bounds = array<i64: 8, 12>}, {pipeline_mode = #tpu.pipeline_mode<synchronous>, transform_indices = @transform_2, window_bounds = array<i64: 16, 512>}, {pipeline_mode = #tpu.pipeline_mode<synchronous>, transform_indices = @transform_3, window_bounds = array<i64: 12, 512>}, {pipeline_mode = #tpu.pipeline_mode<synchronous>, transform_indices = @transform_4, window_bounds = array<i64: 1, 512>}, {pipeline_mode = #tpu.pipeline_mode<synchronous>, transform_indices = @transform_5, window_bounds = array<i64: 1, 512>}, {pipeline_mode = #tpu.pipeline_mode<synchronous>, transform_indices = @transform_6, window_bounds = array<i64: 1, 128>}, {transform_indices = @transform_7, window_bounds = array<i64: 8, 128>}]} {
    %c0 = arith.constant 0 : index
    %c0_0 = arith.constant 0 : index
    %0 = vector.load %arg1[%c0, %c0_0] : memref<8x16xf32, #tpu.memory_space<vmem>>, vector<8x16xf32>
    %c0_1 = arith.constant 0 : index
    %c0_2 = arith.constant 0 : index
    %1 = vector.load %arg3[%c0_1, %c0_2] : memref<16x512xf32, #tpu.memory_space<vmem>>, vector<16x512xf32>
    %cst = arith.constant dense<0.000000e+00> : vector<8x512xf32>
    %2 = tpu.matmul %0, %1, %cst {dimension_numbers = #tpu.dot_dimension_numbers<[1], [0], [0], [1], [0, 0, 1, 1], [], []>} : vector<8x16xf32>, vector<16x512xf32>, vector<8x512xf32> -> vector<8x512xf32>
    %c0_3 = arith.constant 0 : index
    %c0_4 = arith.constant 0 : index
    %3 = vector.load %arg5[%c0_3, %c0_4] : memref<1x512xf32, #tpu.memory_space<vmem>>, vector<1x512xf32>
    %4 = vector.broadcast %3 : vector<1x512xf32> to vector<8x512xf32>
    %5 = arith.addf %2, %4 : vector<8x512xf32>
    %c0_5 = arith.constant 0 : index
    %c0_6 = arith.constant 0 : index
    %6 = vector.load %arg2[%c0_5, %c0_6] : memref<8x12xf32, #tpu.memory_space<vmem>>, vector<8x12xf32>
    %c0_7 = arith.constant 0 : index
    %c0_8 = arith.constant 0 : index
    %7 = vector.load %arg4[%c0_7, %c0_8] : memref<12x512xf32, #tpu.memory_space<vmem>>, vector<12x512xf32>
    %cst_9 = arith.constant dense<0.000000e+00> : vector<8x512xf32>
    %8 = tpu.matmul %6, %7, %cst_9 {dimension_numbers = #tpu.dot_dimension_numbers<[1], [0], [0], [1], [0, 0, 1, 1], [], []>} : vector<8x12xf32>, vector<12x512xf32>, vector<8x512xf32> -> vector<8x512xf32>
    %c0_10 = arith.constant 0 : index
    %c0_11 = arith.constant 0 : index
    %9 = vector.load %arg6[%c0_10, %c0_11] : memref<1x512xf32, #tpu.memory_space<vmem>>, vector<1x512xf32>
    %10 = vector.broadcast %9 : vector<1x512xf32> to vector<8x512xf32>
    %11 = arith.addf %8, %10 : vector<8x512xf32>
    %12 = arith.mulf %5, %11 : vector<8x512xf32>
    %13 = vector.extract_strided_slice %12 {offsets = [0, 0], sizes = [8, 128], strides = [1, 1]} : vector<8x512xf32> to vector<8x128xf32>
    %14 = vector.extract_strided_slice %12 {offsets = [0, 128], sizes = [8, 128], strides = [1, 1]} : vector<8x512xf32> to vector<8x128xf32>
    %15 = arith.addf %13, %14 : vector<8x128xf32>
    %16 = vector.extract_strided_slice %12 {offsets = [0, 256], sizes = [8, 128], strides = [1, 1]} : vector<8x512xf32> to vector<8x128xf32>
    %17 = arith.addf %15, %16 : vector<8x128xf32>
    %18 = vector.extract_strided_slice %12 {offsets = [0, 384], sizes = [8, 128], strides = [1, 1]} : vector<8x512xf32> to vector<8x128xf32>
    %19 = arith.addf %17, %18 : vector<8x128xf32>
    %c0_12 = arith.constant 0 : index
    %c0_13 = arith.constant 0 : index
    %20 = vector.load %arg7[%c0_12, %c0_13] : memref<1x128xf32, #tpu.memory_space<vmem>>, vector<1x128xf32>
    %21 = vector.broadcast %20 : vector<1x128xf32> to vector<8x128xf32>
    %22 = arith.addf %19, %21 : vector<8x128xf32>
    %c0_14 = arith.constant 0 : index
    %c0_15 = arith.constant 0 : index
    %23 = vector.load %arg8[%c0_14, %c0_15] : memref<8x128xf32, #tpu.memory_space<vmem>>, vector<8x128xf32>
    tpu.vector_store %arg8[%c0_14, %c0_15], %22 {strides = array<i32>} : memref<8x128xf32, #tpu.memory_space<vmem>>, vector<8x128xf32>,
    return
  }
  func.func @transform_0(%arg0: i32) -> (i32, i32) {
    %c0_i32 = arith.constant 0 : i32
    %c0_i32_0 = arith.constant 0 : i32
    return %arg0, %c0_i32 : i32, i32
  }
  func.func @transform_1(%arg0: i32) -> (i32, i32) {
    %c0_i32 = arith.constant 0 : i32
    %c0_i32_0 = arith.constant 0 : i32
    return %arg0, %c0_i32 : i32, i32
  }
  func.func @transform_2(%arg0: i32) -> (i32, i32) {
    %c0_i32 = arith.constant 0 : i32
    %c0_i32_0 = arith.constant 0 : i32
    %c0_i32_1 = arith.constant 0 : i32
    return %c0_i32, %c0_i32_0 : i32, i32
  }
  func.func @transform_3(%arg0: i32) -> (i32, i32) {
    %c0_i32 = arith.constant 0 : i32
    %c0_i32_0 = arith.constant 0 : i32
    %c0_i32_1 = arith.constant 0 : i32
    return %c0_i32, %c0_i32_0 : i32, i32
  }
  func.func @transform_4(%arg0: i32) -> (i32, i32) {
    %c0_i32 = arith.constant 0 : i32
    %c0_i32_0 = arith.constant 0 : i32
    %c0_i32_1 = arith.constant 0 : i32
    return %c0_i32, %c0_i32_0 : i32, i32
  }
  func.func @transform_5(%arg0: i32) -> (i32, i32) {
    %c0_i32 = arith.constant 0 : i32
    %c0_i32_0 = arith.constant 0 : i32
    %c0_i32_1 = arith.constant 0 : i32
    return %c0_i32, %c0_i32_0 : i32, i32
  }
  func.func @transform_6(%arg0: i32) -> (i32, i32) {
    %c0_i32 = arith.constant 0 : i32
    %c0_i32_0 = arith.constant 0 : i32
    %c0_i32_1 = arith.constant 0 : i32
    return %c0_i32, %c0_i32_0 : i32, i32
  }
  func.func @transform_7(%arg0: i32) -> (i32, i32) {
    %c0_i32 = arith.constant 0 : i32
    %c0_i32_0 = arith.constant 0 : i32
    return %arg0, %c0_i32 : i32, i32
  }
}

</mosaic_0001>

<llo_original>
// kernel: tpu_custom_call.1
$region0: #{tpu_custom_call.1}
  #allocation0 [shape = 'u32[]', space=smem, size = 0x4, offset = 0x4, fixed_abs, tag = 'smem constant byte address 0x4 - core index']
  #allocation1 [shape = 'u32[144,128]{1,0:T(1,128)}', space=vmem, size = 0x12000, scoped, tag = 'internal scratch']
  %s0 = inlined_call_operand.hbm [shape: f32[8,16], index: 0, kind: input, shape index: {}]
  %s1 = inlined_call_operand.hbm [shape: f32[8,12], index: 1, kind: input, shape index: {}]
  %s2 = inlined_call_operand.hbm [shape: f32[16,512], index: 2, kind: input, shape index: {}]
  %s3 = inlined_call_operand.hbm [shape: f32[12,512], index: 3, kind: input, shape index: {}]
  %s4 = inlined_call_operand.vmem [shape: f32[1,512], index: 4, kind: input, shape index: {}]
  %s5 = inlined_call_operand.vmem [shape: f32[1,512], index: 5, kind: input, shape index: {}]
  %s6 = inlined_call_operand.vmem [shape: f32[1,128], index: 6, kind: input, shape index: {}]
  %s7 = inlined_call_operand.hbm [shape: f32[8,128], index: 7, kind: output, shape index: {}]
  %s8 = sld [smem:[#allocation0]]
  $region54: #{tpu_custom_call.1} parent=0
    _
  %s10 = ssub.s32 1, %s8
  %s11 = scalar_select 0, %s10, %s8
  $region1: #{tpu_custom_call.1} parent=0
    #allocation2 [shape = 'u8[4096]{0}', space=vmem, size = 0x1000, scoped, tag = 'input window, operand 0, single buffered']
    #allocation3 [shape = 's32[1]{0}', space=sflag, size = 0x4, scoped, tag = 'scoped memory for tpu_custom_call.1']
    #allocation4 [shape = 's32[1]{0}', space=sflag, size = 0x4, scoped, tag = 'scoped memory for tpu_custom_call.1']
    #allocation5 [shape = 'u8[4096]{0}', space=vmem, size = 0x1000, scoped, tag = 'input window, operand 1, single buffered']
    #allocation6 [shape = 's32[1]{0}', space=sflag, size = 0x4, scoped, tag = 'scoped memory for tpu_custom_call.1']
    #allocation7 [shape = 'u8[32768]{0}', space=vmem, size = 0x8000, scoped, tag = 'input window, operand 2, single buffered']
    #allocation8 [shape = 'u8[32768]{0}', space=vmem, size = 0x8000, scoped, tag = 'input window, operand 3, single buffered']
    #allocation9 [shape = 's32[1]{0}', space=sflag, size = 0x4, scoped, tag = 'scoped memory for tpu_custom_call.1']
    #allocation10 [shape = 'u8[4096]{0}', space=vmem, size = 0x1000, scoped, tag = 'output window, operand 0, single buffered']
    %12 = vsyncpa [#allocation3], 0
    %13 = vsyncpa [#allocation6], 0
    %14 = vsyncpa [#allocation9], 0
    %15 = vsyncpa [#allocation4], 0
    // Predicated region
    $region2: #{tpu_custom_call.1} parent=1 // pred_check
      _
    $region3: #{tpu_custom_call.1} parent=1 // pred_check_branch
      %17 = sbr.rel (0) target = $region5
    $region4: #{tpu_custom_call.1} parent=1 // pred_region
      %s19 = ssub.s32 128, 128
      %20 = vsyncadd [#allocation3], %s19
      %s22 = sshll.u32 [#allocation2], 4
      %s23 = int_to_ptr.vmem [resolvable:$true] %s22
      %25 = dma.hbm_to_vmem [thread:$0]  %s0, 128, %s23, [#allocation3]
    $region5: #{tpu_custom_call.1} parent=1 // pred_fallthru
      _
    // Predicated region
    $region6: #{tpu_custom_call.1} parent=1 // pred_check
      _
    $region7: #{tpu_custom_call.1} parent=1 // pred_check_branch
      %27 = sbr.rel (0) target = $region9
    $region8: #{tpu_custom_call.1} parent=1 // pred_region
      %s29 = ssub.s32 128, 128
      %30 = vsyncadd [#allocation6], %s29
      %s32 = sshll.u32 [#allocation5], 4
      %s33 = int_to_ptr.vmem [resolvable:$true] %s32
      %35 = dma.hbm_to_vmem [thread:$0]  %s1, 128, %s33, [#allocation6]
    $region9: #{tpu_custom_call.1} parent=1 // pred_fallthru
      _
    // Predicated region
    $region10: #{tpu_custom_call.1} parent=1 // pred_check
      _
    $region11: #{tpu_custom_call.1} parent=1 // pred_check_branch
      %37 = sbr.rel (0) target = $region13
    $region12: #{tpu_custom_call.1} parent=1 // pred_region
      %s39 = ssub.s32 1024, 1024
      %40 = vsyncadd [#allocation6], %s39
      %s41 = sshll.u32 [#allocation7], 4
      %s42 = int_to_ptr.vmem [resolvable:$true] %s41
      %47 = dma.hbm_to_vmem [thread:$0]  %s2, 1024, %s42, [#allocation6], 512, 512, 32
    $region13: #{tpu_custom_call.1} parent=1 // pred_fallthru
      _
    // Predicated region
    $region14: #{tpu_custom_call.1} parent=1 // pred_check
      _
    $region15: #{tpu_custom_call.1} parent=1 // pred_check_branch
      %49 = sbr.rel (0) target = $region17
    $region16: #{tpu_custom_call.1} parent=1 // pred_region
      %s51 = ssub.s32 1024, 1024
      %52 = vsyncadd [#allocation9], %s51
      %s53 = sshll.u32 [#allocation8], 4
      %s54 = int_to_ptr.vmem [resolvable:$true] %s53
      %59 = dma.hbm_to_vmem [thread:$0]  %s3, 1024, %s54, [#allocation9], 512, 512, 32
    $region17: #{tpu_custom_call.1} parent=1 // pred_fallthru
      _
    // Predicated region
    $region18: #{tpu_custom_call.1} parent=1 // pred_check
      _
    $region19: #{tpu_custom_call.1} parent=1 // pred_check_branch
      %61 = sbr.rel (0) target = $region21
    $region20: #{tpu_custom_call.1} parent=1 // pred_region
      _
    $region21: #{tpu_custom_call.1} parent=1 // pred_fallthru
      _
    // Predicated region
    $region22: #{tpu_custom_call.1} parent=1 // pred_check
      _
    $region23: #{tpu_custom_call.1} parent=1 // pred_check_branch
      %63 = sbr.rel (0) target = $region25
    $region24: #{tpu_custom_call.1} parent=1 // pred_region
      _
    $region25: #{tpu_custom_call.1} parent=1 // pred_fallthru
      _
    // Predicated region
    $region26: #{tpu_custom_call.1} parent=1 // pred_check
      _
    $region27: #{tpu_custom_call.1} parent=1 // pred_check_branch
      %65 = sbr.rel (0) target = $region29
    $region28: #{tpu_custom_call.1} parent=1 // pred_region
      _
    $region29: #{tpu_custom_call.1} parent=1 // pred_fallthru
      _
    // Predicated region
    $region30: #{tpu_custom_call.1} parent=1 // pred_check
      _
    $region31: #{tpu_custom_call.1} parent=1 // pred_check_branch
      %67 = sbr.rel (0) target = $region33
    $region32: #{tpu_custom_call.1} parent=1 // pred_region
      %68 = dma.done [#allocation3], 128
    $region33: #{tpu_custom_call.1} parent=1 // pred_fallthru
      _
    // Predicated region
    $region34: #{tpu_custom_call.1} parent=1 // pred_check
      _
    $region35: #{tpu_custom_call.1} parent=1 // pred_check_branch
      %70 = sbr.rel (0) target = $region37
    $region36: #{tpu_custom_call.1} parent=1 // pred_region
      %71 = dma.done [#allocation6], 128
    $region37: #{tpu_custom_call.1} parent=1 // pred_fallthru
      _
    // Predicated region
    $region38: #{tpu_custom_call.1} parent=1 // pred_check
      _
    $region39: #{tpu_custom_call.1} parent=1 // pred_check_branch
      %73 = sbr.rel (0) target = $region41
    $region40: #{tpu_custom_call.1} parent=1 // pred_region
      %74 = dma.done [#allocation6], 1024
    $region41: #{tpu_custom_call.1} parent=1 // pred_fallthru
      _
    // Predicated region
    $region42: #{tpu_custom_call.1} parent=1 // pred_check
      _
    $region43: #{tpu_custom_call.1} parent=1 // pred_check_branch
      %76 = sbr.rel (0) target = $region45
    $region44: #{tpu_custom_call.1} parent=1 // pred_region
      %77 = dma.done [#allocation9], 1024
    $region45: #{tpu_custom_call.1} parent=1 // pred_fallthru
      _
    %v78 = vld [vmem:[#allocation2] sm:$0xff]
    %v79 = vld [vmem:[#allocation7] sm:$0xff]
    %v80 = vld [vmem:[#allocation7 + $0x8] sm:$0xff]
    %v81 = vld [vmem:[#allocation7 + $0x10] sm:$0xff]
    %v82 = vld [vmem:[#allocation7 + $0x18] sm:$0xff]
    %v83 = vld [vmem:[#allocation7 + $0x20] sm:$0xff]
    %v84 = vld [vmem:[#allocation7 + $0x28] sm:$0xff]
    %v85 = vld [vmem:[#allocation7 + $0x30] sm:$0xff]
    %v86 = vld [vmem:[#allocation7 + $0x38] sm:$0xff]
    %v87 = vld [vmem:[%s4] sm:$0xf]
    %v89 = vlaneseq
    %v90 = vshrl.u32 %v89, 7
    %v91 = vsub.s32 0, %v90
    %v92 = vrot.slane %v87, %v91
    %v93 = vlaneseq
    %v94 = vshrl.u32 %v93, 7
    %v95 = vsub.s32 1, %v94
    %v96 = vrot.slane %v87, %v95
    %v97 = vlaneseq
    %v98 = vshrl.u32 %v97, 7
    %v99 = vsub.s32 2, %v98
    %v100 = vrot.slane %v87, %v99
    %v101 = vlaneseq
    %v102 = vshrl.u32 %v101, 7
    %v103 = vsub.s32 3, %v102
    %v104 = vrot.slane %v87, %v103
    %vm109 = vcmask 130048
    %v111 = vsel %vm109, %v78, 0
    %113 = vmatprep.subr.mxu0 0.0
    %114 = vmatpush1.msra.mxu0 0.0
    %115 = vmatprep.subr.mxu0 0.0
    %116 = vmatpush1.msra.mxu0 0.0
    %117 = vmatprep.subr.mxu0 0.0
    %118 = vmatpush1.msra.mxu0 0.0
    %119 = vmatprep.subr.mxu0 0.0
    %120 = vmatpush1.msra.mxu0 0.0
    %121 = vmatprep.subr.mxu0 0.0
    %122 = vmatpush1.msra.mxu0 0.0
    %123 = vmatprep.subr.mxu0 0.0
    %124 = vmatpush1.msra.mxu0 0.0
    %125 = vmatprep.subr.mxu0 0.0
    %126 = vmatpush1.msra.mxu0 0.0
    %127 = vmatprep.subr.mxu0 0.0
    %128 = vmatpush1.msra.mxu0 0.0
    %129 = vmatprep.subr.mxu0 0.0
    %130 = vmatpush1.msra.mxu0 0.0
    %131 = vmatprep.subr.mxu0 0.0
    %132 = vmatpush1.msra.mxu0 0.0
    %133 = vmatprep.subr.mxu0 0.0
    %134 = vmatpush1.msra.mxu0 0.0
    %135 = vmatprep.subr.mxu0 0.0
    %136 = vmatpush1.msra.mxu0 0.0
    %137 = vmatprep.subr.mxu0 0.0
    %138 = vmatpush1.msra.mxu0 0.0
    %139 = vmatprep.subr.mxu0 0.0
    %140 = vmatpush1.msra.mxu0 0.0
    %141 = vmatprep.subr.mxu0 %v84
    %142 = vmatpush1.msra.mxu0 %v83
    %143 = vmatprep.subr.mxu0 %v80
    %144 = vmatpush1.msra.mxu0 %v79
    %145 = vmatprep.subr.mxu0 0.0
    %146 = vmatpush2.msra.mxu0 0.0
    %147 = vmatprep.subr.mxu0 0.0
    %148 = vmatpush2.msra.mxu0 0.0
    %149 = vmatprep.subr.mxu0 0.0
    %150 = vmatpush2.msra.mxu0 0.0
    %151 = vmatprep.subr.mxu0 0.0
    %152 = vmatpush2.msra.mxu0 0.0
    %153 = vmatprep.subr.mxu0 0.0
    %154 = vmatpush2.msra.mxu0 0.0
    %155 = vmatprep.subr.mxu0 0.0
    %156 = vmatpush2.msra.mxu0 0.0
    %157 = vmatprep.subr.mxu0 0.0
    %158 = vmatpush2.msra.mxu0 0.0
    %159 = vmatprep.subr.mxu0 0.0
    %160 = vmatpush2.msra.mxu0 0.0
    %161 = vmatprep.subr.mxu0 0.0
    %162 = vmatpush2.msra.mxu0 0.0
    %163 = vmatprep.subr.mxu0 0.0
    %164 = vmatpush2.msra.mxu0 0.0
    %165 = vmatprep.subr.mxu0 0.0
    %166 = vmatpush2.msra.mxu0 0.0
    %167 = vmatprep.subr.mxu0 0.0
    %168 = vmatpush2.msra.mxu0 0.0
    %169 = vmatprep.subr.mxu0 0.0
    %170 = vmatpush2.msra.mxu0 0.0
    %171 = vmatprep.subr.mxu0 0.0
    %172 = vmatpush2.msra.mxu0 0.0
    %173 = vmatprep.subr.mxu0 0.0
    %174 = vmatpush2.msra.mxu0 0.0
    %175 = vmatprep.subr.mxu0 0.0
    %176 = vmatpush2.msra.mxu0 0.0
    %177 = vmatprep.mubr.f32.mxu0 0.0
    %178 = vmatmul.mubr.f32.gmra.mxu0 %v111
    %v179 = vpop.f32.mrf.mxu0
    %v180 = vadd.f32 %v92, %v179
    %v181 = vpop.f32.mrf.mxu0
    %v182 = vadd.f32 %v96, %v181
    %183 = vdwg.mxu0
    %184 = vmatprep.subr.mxu0 0.0
    %185 = vmatpush1.msra.mxu0 0.0
    %186 = vmatprep.subr.mxu0 0.0
    %187 = vmatpush1.msra.mxu0 0.0
    %188 = vmatprep.subr.mxu0 0.0
    %189 = vmatpush1.msra.mxu0 0.0
    %190 = vmatprep.subr.mxu0 0.0
    %191 = vmatpush1.msra.mxu0 0.0
    %192 = vmatprep.subr.mxu0 0.0
    %193 = vmatpush1.msra.mxu0 0.0
    %194 = vmatprep.subr.mxu0 0.0
    %195 = vmatpush1.msra.mxu0 0.0
    %196 = vmatprep.subr.mxu0 0.0
    %197 = vmatpush1.msra.mxu0 0.0
    %198 = vmatprep.subr.mxu0 0.0
    %199 = vmatpush1.msra.mxu0 0.0
    %200 = vmatprep.subr.mxu0 0.0
    %201 = vmatpush1.msra.mxu0 0.0
    %202 = vmatprep.subr.mxu0 0.0
    %203 = vmatpush1.msra.mxu0 0.0
    %204 = vmatprep.subr.mxu0 0.0
    %205 = vmatpush1.msra.mxu0 0.0
    %206 = vmatprep.subr.mxu0 0.0
    %207 = vmatpush1.msra.mxu0 0.0
    %208 = vmatprep.subr.mxu0 0.0
    %209 = vmatpush1.msra.mxu0 0.0
    %210 = vmatprep.subr.mxu0 0.0
    %211 = vmatpush1.msra.mxu0 0.0
    %212 = vmatprep.subr.mxu0 %v86
    %213 = vmatpush1.msra.mxu0 %v85
    %214 = vmatprep.subr.mxu0 %v82
    %215 = vmatpush1.msra.mxu0 %v81
    %216 = vmatprep.subr.mxu0 0.0
    %217 = vmatpush2.msra.mxu0 0.0
    %218 = vmatprep.subr.mxu0 0.0
    %219 = vmatpush2.msra.mxu0 0.0
    %220 = vmatprep.subr.mxu0 0.0
    %221 = vmatpush2.msra.mxu0 0.0
    %222 = vmatprep.subr.mxu0 0.0
    %223 = vmatpush2.msra.mxu0 0.0
    %224 = vmatprep.subr.mxu0 0.0
    %225 = vmatpush2.msra.mxu0 0.0
    %226 = vmatprep.subr.mxu0 0.0
    %227 = vmatpush2.msra.mxu0 0.0
    %228 = vmatprep.subr.mxu0 0.0
    %229 = vmatpush2.msra.mxu0 0.0
    %230 = vmatprep.subr.mxu0 0.0
    %231 = vmatpush2.msra.mxu0 0.0
    %232 = vmatprep.subr.mxu0 0.0
    %233 = vmatpush2.msra.mxu0 0.0
    %234 = vmatprep.subr.mxu0 0.0
    %235 = vmatpush2.msra.mxu0 0.0
    %236 = vmatprep.subr.mxu0 0.0
    %237 = vmatpush2.msra.mxu0 0.0
    %238 = vmatprep.subr.mxu0 0.0
    %239 = vmatpush2.msra.mxu0 0.0
    %240 = vmatprep.subr.mxu0 0.0
    %241 = vmatpush2.msra.mxu0 0.0
    %242 = vmatprep.subr.mxu0 0.0
    %243 = vmatpush2.msra.mxu0 0.0
    %244 = vmatprep.subr.mxu0 0.0
    %245 = vmatpush2.msra.mxu0 0.0
    %246 = vmatprep.subr.mxu0 0.0
    %247 = vmatpush2.msra.mxu0 0.0
    %248 = vmatprep.mubr.f32.mxu0 0.0
    %249 = vmatmul.mubr.f32.gmra.mxu0 %v111
    %v250 = vpop.f32.mrf.mxu0
    %v251 = vadd.f32 %v100, %v250
    %v252 = vpop.f32.mrf.mxu0
    %v253 = vadd.f32 %v104, %v252
    %254 = vdwg.mxu0
    %v255 = vld [vmem:[#allocation5] sm:$0xff]
    %v256 = vld [vmem:[#allocation8] sm:$0xff]
    %v257 = vld [vmem:[#allocation8 + $0x8] sm:$0xff]
    %v258 = vld [vmem:[#allocation8 + $0x10] sm:$0xff]
    %v259 = vld [vmem:[#allocation8 + $0x18] sm:$0xff]
    %v260 = vld [vmem:[#allocation8 + $0x20] sm:$0xf]
    %v261 = vld [vmem:[#allocation8 + $0x28] sm:$0xf]
    %v262 = vld [vmem:[#allocation8 + $0x30] sm:$0xf]
    %v263 = vld [vmem:[#allocation8 + $0x38] sm:$0xf]
    %v264 = vld [vmem:[%s5] sm:$0xf]
    %v266 = vlaneseq
    %v267 = vshrl.u32 %v266, 7
    %v268 = vsub.s32 0, %v267
    %v269 = vrot.slane %v264, %v268
    %v270 = vlaneseq
    %v271 = vshrl.u32 %v270, 7
    %v272 = vsub.s32 1, %v271
    %v273 = vrot.slane %v264, %v272
    %v274 = vlaneseq
    %v275 = vshrl.u32 %v274, 7
    %v276 = vsub.s32 2, %v275
    %v277 = vrot.slane %v264, %v276
    %v278 = vlaneseq
    %v279 = vshrl.u32 %v278, 7
    %v280 = vsub.s32 3, %v279
    %v281 = vrot.slane %v264, %v280
    %vm286 = vcmask 97280
    %v288 = vsel %vm286, %v255, 0
    %vm290 = vcmask 1043456
    %v292 = vsel %vm290, %v260, 0
    %v295 = vsel %vm290, %v261, 0
    %v298 = vsel %vm290, %v262, 0
    %v301 = vsel %vm290, %v263, 0
    %303 = vmatprep.subr.mxu0 0.0
    %304 = vmatpush1.msra.mxu0 0.0
    %305 = vmatprep.subr.mxu0 0.0
    %306 = vmatpush1.msra.mxu0 0.0
    %307 = vmatprep.subr.mxu0 0.0
    %308 = vmatpush1.msra.mxu0 0.0
    %309 = vmatprep.subr.mxu0 0.0
    %310 = vmatpush1.msra.mxu0 0.0
    %311 = vmatprep.subr.mxu0 0.0
    %312 = vmatpush1.msra.mxu0 0.0
    %313 = vmatprep.subr.mxu0 0.0
    %314 = vmatpush1.msra.mxu0 0.0
    %315 = vmatprep.subr.mxu0 0.0
    %316 = vmatpush1.msra.mxu0 0.0
    %317 = vmatprep.subr.mxu0 0.0
    %318 = vmatpush1.msra.mxu0 0.0
    %319 = vmatprep.subr.mxu0 0.0
    %320 = vmatpush1.msra.mxu0 0.0
    %321 = vmatprep.subr.mxu0 0.0
    %322 = vmatpush1.msra.mxu0 0.0
    %323 = vmatprep.subr.mxu0 0.0
    %324 = vmatpush1.msra.mxu0 0.0
    %325 = vmatprep.subr.mxu0 0.0
    %326 = vmatpush1.msra.mxu0 0.0
    %327 = vmatprep.subr.mxu0 0.0
    %328 = vmatpush1.msra.mxu0 0.0
    %329 = vmatprep.subr.mxu0 0.0
    %330 = vmatpush1.msra.mxu0 0.0
    %331 = vmatprep.subr.mxu0 %v295
    %332 = vmatpush1.msra.mxu0 %v292
    %333 = vmatprep.subr.mxu0 %v257
    %334 = vmatpush1.msra.mxu0 %v256
    %335 = vmatprep.subr.mxu0 0.0
    %336 = vmatpush2.msra.mxu0 0.0
    %337 = vmatprep.subr.mxu0 0.0
    %338 = vmatpush2.msra.mxu0 0.0
    %339 = vmatprep.subr.mxu0 0.0
    %340 = vmatpush2.msra.mxu0 0.0
    %341 = vmatprep.subr.mxu0 0.0
    %342 = vmatpush2.msra.mxu0 0.0
    %343 = vmatprep.subr.mxu0 0.0
    %344 = vmatpush2.msra.mxu0 0.0
    %345 = vmatprep.subr.mxu0 0.0
    %346 = vmatpush2.msra.mxu0 0.0
    %347 = vmatprep.subr.mxu0 0.0
    %348 = vmatpush2.msra.mxu0 0.0
    %349 = vmatprep.subr.mxu0 0.0
    %350 = vmatpush2.msra.mxu0 0.0
    %351 = vmatprep.subr.mxu0 0.0
    %352 = vmatpush2.msra.mxu0 0.0
    %353 = vmatprep.subr.mxu0 0.0
    %354 = vmatpush2.msra.mxu0 0.0
    %355 = vmatprep.subr.mxu0 0.0
    %356 = vmatpush2.msra.mxu0 0.0
    %357 = vmatprep.subr.mxu0 0.0
    %358 = vmatpush2.msra.mxu0 0.0
    %359 = vmatprep.subr.mxu0 0.0
    %360 = vmatpush2.msra.mxu0 0.0
    %361 = vmatprep.subr.mxu0 0.0
    %362 = vmatpush2.msra.mxu0 0.0
    %363 = vmatprep.subr.mxu0 0.0
    %364 = vmatpush2.msra.mxu0 0.0
    %365 = vmatprep.subr.mxu0 0.0
    %366 = vmatpush2.msra.mxu0 0.0
    %367 = vmatprep.mubr.f32.mxu0 0.0
    %368 = vmatmul.mubr.f32.gmra.mxu0 %v288
    %v369 = vpop.f32.mrf.mxu0
    %v370 = vadd.f32 %v269, %v369
    %v371 = vpop.f32.mrf.mxu0
    %v372 = vadd.f32 %v273, %v371
    %373 = vdwg.mxu0
    %374 = vmatprep.subr.mxu0 0.0
    %375 = vmatpush1.msra.mxu0 0.0
    %376 = vmatprep.subr.mxu0 0.0
    %377 = vmatpush1.msra.mxu0 0.0
    %378 = vmatprep.subr.mxu0 0.0
    %379 = vmatpush1.msra.mxu0 0.0
    %380 = vmatprep.subr.mxu0 0.0
    %381 = vmatpush1.msra.mxu0 0.0
    %382 = vmatprep.subr.mxu0 0.0
    %383 = vmatpush1.msra.mxu0 0.0
    %384 = vmatprep.subr.mxu0 0.0
    %385 = vmatpush1.msra.mxu0 0.0
    %386 = vmatprep.subr.mxu0 0.0
    %387 = vmatpush1.msra.mxu0 0.0
    %388 = vmatprep.subr.mxu0 0.0
    %389 = vmatpush1.msra.mxu0 0.0
    %390 = vmatprep.subr.mxu0 0.0
    %391 = vmatpush1.msra.mxu0 0.0
    %392 = vmatprep.subr.mxu0 0.0
    %393 = vmatpush1.msra.mxu0 0.0
    %394 = vmatprep.subr.mxu0 0.0
    %395 = vmatpush1.msra.mxu0 0.0
    %396 = vmatprep.subr.mxu0 0.0
    %397 = vmatpush1.msra.mxu0 0.0
    %398 = vmatprep.subr.mxu0 0.0
    %399 = vmatpush1.msra.mxu0 0.0
    %400 = vmatprep.subr.mxu0 0.0
    %401 = vmatpush1.msra.mxu0 0.0
    %402 = vmatprep.subr.mxu0 %v301
    %403 = vmatpush1.msra.mxu0 %v298
    %404 = vmatprep.subr.mxu0 %v259
    %405 = vmatpush1.msra.mxu0 %v258
    %406 = vmatprep.subr.mxu0 0.0
    %407 = vmatpush2.msra.mxu0 0.0
    %408 = vmatprep.subr.mxu0 0.0
    %409 = vmatpush2.msra.mxu0 0.0
    %410 = vmatprep.subr.mxu0 0.0
    %411 = vmatpush2.msra.mxu0 0.0
    %412 = vmatprep.subr.mxu0 0.0
    %413 = vmatpush2.msra.mxu0 0.0
    %414 = vmatprep.subr.mxu0 0.0
    %415 = vmatpush2.msra.mxu0 0.0
    %416 = vmatprep.subr.mxu0 0.0
    %417 = vmatpush2.msra.mxu0 0.0
    %418 = vmatprep.subr.mxu0 0.0
    %419 = vmatpush2.msra.mxu0 0.0
    %420 = vmatprep.subr.mxu0 0.0
    %421 = vmatpush2.msra.mxu0 0.0
    %422 = vmatprep.subr.mxu0 0.0
    %423 = vmatpush2.msra.mxu0 0.0
    %424 = vmatprep.subr.mxu0 0.0
    %425 = vmatpush2.msra.mxu0 0.0
    %426 = vmatprep.subr.mxu0 0.0
    %427 = vmatpush2.msra.mxu0 0.0
    %428 = vmatprep.subr.mxu0 0.0
    %429 = vmatpush2.msra.mxu0 0.0
    %430 = vmatprep.subr.mxu0 0.0
    %431 = vmatpush2.msra.mxu0 0.0
    %432 = vmatprep.subr.mxu0 0.0
    %433 = vmatpush2.msra.mxu0 0.0
    %434 = vmatprep.subr.mxu0 0.0
    %435 = vmatpush2.msra.mxu0 0.0
    %436 = vmatprep.subr.mxu0 0.0
    %437 = vmatpush2.msra.mxu0 0.0
    %438 = vmatprep.mubr.f32.mxu0 0.0
    %439 = vmatmul.mubr.f32.gmra.mxu0 %v288
    %v440 = vpop.f32.mrf.mxu0
    %v441 = vadd.f32 %v277, %v440
    %v442 = vpop.f32.mrf.mxu0
    %v443 = vadd.f32 %v281, %v442
    %444 = vdwg.mxu0
    %v445 = vmul.f32 %v180, %v370
    %v446 = vmul.f32 %v182, %v372
    %v447 = vmul.f32 %v251, %v441
    %v448 = vmul.f32 %v253, %v443
    %v449 = vadd.f32 %v445, %v446
    %v450 = vadd.f32 %v449, %v447
    %v451 = vadd.f32 %v450, %v448
    %v452 = vld [vmem:[%s6] sm:$0x1]
    %v454 = vlaneseq
    %v455 = vshrl.u32 %v454, 7
    %v456 = vsub.s32 0, %v455
    %v457 = vrot.slane %v452, %v456
    %v459 = vadd.f32 %v451, %v457
    %460 = vst [vmem:[#allocation10] sm:$0xff] %v459
    // Predicated region
    $region46: #{tpu_custom_call.1} parent=1 // pred_check
      _
    $region47: #{tpu_custom_call.1} parent=1 // pred_check_branch
      %462 = sbr.rel (0) target = $region49
    $region48: #{tpu_custom_call.1} parent=1 // pred_region
      %s464 = ssub.s32 128, 128
      %465 = vsyncadd [#allocation4], %s464
      %s467 = sshll.u32 [#allocation10], 4
      %s468 = int_to_ptr.vmem [resolvable:$true] %s467
      %470 = dma.vmem_to_hbm [thread:$0]  %s468, 128, %s7, [#allocation4]
    $region49: #{tpu_custom_call.1} parent=1 // pred_fallthru
      _
    // Predicated region
    $region50: #{tpu_custom_call.1} parent=1 // pred_check
      _
    $region51: #{tpu_custom_call.1} parent=1 // pred_check_branch
      %472 = sbr.rel (0) target = $region53
    $region52: #{tpu_custom_call.1} parent=1 // pred_region
      %473 = dma.done [#allocation4], 128
    $region53: #{tpu_custom_call.1} parent=1 // pred_fallthru
      _
    %474 = vsyncpa [#allocation3], 1
    %475 = vsyncpa [#allocation6], 1
    %476 = vsyncpa [#allocation9], 1
    %477 = vsyncpa [#allocation4], 1

</llo_original>
